<compile_context>
chip_gen: v5e
topology: v5e:2x2
jax: 0.10.0
libtpu: 0.0.40
codegen_flags: <defaults>
</compile_context>

<pallas_src>
import math

import jax
import jax.numpy as jnp
import numpy as np
from jax import lax
from jax.experimental import pallas as pl
from jax.experimental.pallas import tpu as pltpu

_SUBLANE = 8
_MAX_BLOCK_BYTES = 2 << 20           # per-input DMA block cap (~2 MiB)
_INPUT_BUFFER_BUDGET = 24 << 20      # all inputs x double-buffer VMEM budget
_VMEM_LIMIT_BYTES = 40 << 20         # scoped VMEM limit (< 64 MiB physical on v7x)
_FUSED_MAX_BYTES = 1 << 20           # whole-loss single-block fused path threshold
_SINGLE_MAX_BYTES = 256 << 10        # per-tensor single-block path threshold
_SINGLE_BLOCK_CAP = 2 << 20          # hard cap for any grid=(1,) whole-array block
_MIN_GRID_STEPS = 4                  # aim for >=4 pipelined grid steps when tiling


# ---------------------------------------------------------------------------
# Helpers
# ---------------------------------------------------------------------------
def _as_2d(x):
    """Collapse leading dims (layout-preserving); 0/1-D become a single row."""
    if x.ndim >= 2:
        return x.reshape(-1, x.shape[-1])
    return x.reshape(1, -1)


_CACHED_CHUNKS = None


def _num_chunks():
    """Parallel chunks for the leading grid axis, gated on device generation."""
    global _CACHED_CHUNKS
    if _CACHED_CHUNKS is None:
        n = 1
        try:
            kind = jax.devices()[0].device_kind.lower()
            if any(tag in kind for tag in ("v4", "v5p", "v7")):  # dual-TC chips
                n = 2
        except Exception:
            n = 1
        _CACHED_CHUNKS = n
    return _CACHED_CHUNKS


def _can_tile(rows, row_bytes_list):
    """Block rows (multiple of 8) for the tiled path, or None if not tileable."""
    if rows < _SUBLANE:
        return None
    max_rb = max(row_bytes_list)
    sum_rb = sum(row_bytes_list)
    budget_cap = min(_MAX_BLOCK_BYTES // max_rb,
                     _INPUT_BUFFER_BUDGET // (2 * sum_rb))
    if budget_cap < _SUBLANE:
        # TODO(synk): enormous last dims cannot be row-tiled; caller falls back.
        return None
    steps_cap = max(_SUBLANE, -(-rows // _MIN_GRID_STEPS))
    block_rows = min(budget_cap, steps_cap)
    return (block_rows // _SUBLANE) * _SUBLANE


# ---------------------------------------------------------------------------
# Fused single-block kernel (small inputs): one pallas_call for the whole loss
# ---------------------------------------------------------------------------
def _make_fused_small_kernel(n_lik):
    def kernel(*refs):
        lik_refs = refs[:n_lik]
        xhat_ref = refs[n_lik]
        tgt_ref = refs[n_lik + 1]
        logsum_ref = refs[n_lik + 2]
        sqsum_ref = refs[n_lik + 3]

        total = jnp.float32(0.0)
        for r in lik_refs:
            total = total + jnp.sum(jnp.log(r[...].astype(jnp.float32)))
        logsum_ref[...] = jnp.reshape(total, (1, 1))

        d = xhat_ref[...].astype(jnp.float32) - tgt_ref[...].astype(jnp.float32)
        sqsum_ref[...] = jnp.reshape(jnp.sum(d * d), (1, 1))

    return kernel


def _fused_small_loss_sums(likelihoods, x_hat, target):
    inputs = [_as_2d(t) for t in likelihoods] + [_as_2d(x_hat), _as_2d(target)]
    n_lik = len(likelihoods)
    log_sum, sq_sum = pl.pallas_call(
        _make_fused_small_kernel(n_lik),
        out_shape=(jax.ShapeDtypeStruct((1, 1), jnp.float32),
                   jax.ShapeDtypeStruct((1, 1), jnp.float32)),
        grid=(1,),
        in_specs=[pl.BlockSpec(t.shape, lambda i: (0, 0)) for t in inputs],
        out_specs=(pl.BlockSpec((1, 1), lambda i: (0, 0)),
                   pl.BlockSpec((1, 1), lambda i: (0, 0))),
        compiler_params=pltpu.CompilerParams(dimension_semantics=("arbitrary",)),
    )(*inputs)
    return log_sum[0, 0], sq_sum[0, 0]


# ---------------------------------------------------------------------------
# Single-block per-tensor kernels (tiny leftover tensors)
# ---------------------------------------------------------------------------
def _single_sum_log_kernel(x_ref, o_ref):
    o_ref[...] = jnp.reshape(
        jnp.sum(jnp.log(x_ref[...].astype(jnp.float32))), (1, 1))


def _single_sum_sqdiff_kernel(a_ref, b_ref, o_ref):
    d = a_ref[...].astype(jnp.float32) - b_ref[...].astype(jnp.float32)
    o_ref[...] = jnp.reshape(jnp.sum(d * d), (1, 1))


def _single_call(kernel, arrays):
    out = pl.pallas_call(
        kernel,
        out_shape=jax.ShapeDtypeStruct((1, 1), jnp.float32),
        grid=(1,),
        in_specs=[pl.BlockSpec(a.shape, lambda i: (0, 0)) for a in arrays],
        out_specs=pl.BlockSpec((1, 1), lambda i: (0, 0)),
        compiler_params=pltpu.CompilerParams(dimension_semantics=("arbitrary",)),
    )(*arrays)
    return out[0, 0]


# ---------------------------------------------------------------------------
# Fused tiled streaming reduction (large inputs)
# ---------------------------------------------------------------------------
def _make_tiled_kernel(n_lik, with_sq, block_rows, cols, steps_per_chunk, rows,
                       first_special, needs_mask):
    groups = block_rows // _SUBLANE

    def kernel(*refs):
        pos = 0
        if with_sq:
            xh_ref = refs[0]
            tg_ref = refs[1]
            pos = 2
        lik_refs = refs[pos:pos + n_lik]
        pos += n_lik
        if with_sq:
            sq_out = refs[pos]; pos += 1
        if n_lik:
            log_out = refs[pos]; pos += 1
        if with_sq:
            sq_acc = refs[pos]; pos += 1
        if n_lik:
            log_acc = refs[pos]; pos += 1

        c = pl.program_id(0)
        i = pl.program_id(1)

        @pl.when(i == 0)
        def _init():
            if with_sq:
                sq_acc[...] = jnp.zeros_like(sq_acc)
            if n_lik:
                log_acc[...] = jnp.zeros_like(log_acc)

        def accumulate(masked):
            if masked:
                blk = c * steps_per_chunk + i
                row_ids = (blk * block_rows
                           + lax.broadcasted_iota(jnp.int32, (block_rows, cols), 0))
                valid = row_ids < rows
            if with_sq:
                d = xh_ref[...].astype(jnp.float32) - tg_ref[...].astype(jnp.float32)
                if masked:
                    d = jnp.where(valid, d, 0.0)
                sq_acc[...] += jnp.sum((d * d).reshape(groups, _SUBLANE, cols), axis=0)
            for lr in lik_refs:
                x = lr[...].astype(jnp.float32)
                if masked:
                    x = jnp.where(valid, x, 1.0)      # log(1) == 0 -> no contribution
                log_acc[...] += jnp.sum(
                    jnp.log(x).reshape(groups, _SUBLANE, cols), axis=0)

        if not needs_mask:
            accumulate(False)
        else:
            is_special = (c * steps_per_chunk + i) >= first_special

            @pl.when(jnp.logical_not(is_special))
            def _full():
                accumulate(False)

            @pl.when(is_special)
            def _tail():
                accumulate(True)

        @pl.when(i == steps_per_chunk - 1)
        def _finalize():
            if with_sq:
                sq_out[...] = jnp.reshape(jnp.sum(sq_acc[...]), (1, 1, 1))
            if n_lik:
                log_out[...] = jnp.reshape(jnp.sum(log_acc[...]), (1, 1, 1))

    return kernel


def _tiled_sums(lik_list, pair, block_rows):
    """Stream all arrays (same 2-D shape) once; return (sq_sum or None, log_sum or None)."""
    arrays = (list(pair) if pair is not None else []) + list(lik_list)
    n_lik = len(lik_list)
    with_sq = pair is not None
    rows, cols = arrays[0].shape

    num_blocks = pl.cdiv(rows, block_rows)
    chunks = _num_chunks()
    chunks = chunks if num_blocks >= chunks else 1
    steps = pl.cdiv(num_blocks, chunks)
    ragged = (rows % block_rows) != 0
    needs_mask = ragged or (chunks * steps != num_blocks)
    first_special = (num_blocks - 1) if ragged else num_blocks

    def in_map(c, i):
        blk = c * steps + i
        # Clamp duplicated trailing blocks; their rows are masked out in-kernel.
        return (jnp.minimum(blk, num_blocks - 1), 0)

    def out_map(c, i):
        return (c, 0, 0)

    n_out = (1 if with_sq else 0) + (1 if n_lik else 0)
    out_shape = tuple(jax.ShapeDtypeStruct((chunks, 1, 1), jnp.float32)
                      for _ in range(n_out))
    out_specs = tuple(pl.BlockSpec((1, 1, 1), out_map) for _ in range(n_out))
    scratch = [pltpu.VMEM((_SUBLANE, cols), jnp.float32) for _ in range(n_out)]

    kernel = _make_tiled_kernel(n_lik, with_sq, block_rows, cols, steps, rows,
                                first_special, needs_mask)

    outs = pl.pallas_call(
        kernel,
        out_shape=out_shape,
        grid=(chunks, steps),
        in_specs=[pl.BlockSpec((block_rows, cols), in_map) for _ in arrays],
        out_specs=out_specs,
        scratch_shapes=scratch,
        compiler_params=pltpu.CompilerParams(
            dimension_semantics=("parallel", "arbitrary"),
            vmem_limit_bytes=_VMEM_LIMIT_BYTES),
    )(*arrays)
    if not isinstance(outs, (tuple, list)):
        outs = (outs,)

    idx = 0
    sq_sum = None
    log_sum = None
    if with_sq:
        sq_sum = jnp.sum(outs[idx])
        idx += 1
    if n_lik:
        log_sum = jnp.sum(outs[idx])
    return sq_sum, log_sum


# ---------------------------------------------------------------------------
# Per-tensor wrappers
# ---------------------------------------------------------------------------
def pallas_sum_log(x):
    """sum(log(x)) over all elements of x (float32 scalar)."""
    x2 = _as_2d(x)
    rows, cols = x2.shape
    nbytes = int(x2.size) * x2.dtype.itemsize
    if nbytes > _SINGLE_MAX_BYTES:
        block_rows = _can_tile(rows, [cols * x2.dtype.itemsize])
        if block_rows is not None:
            _, log_sum = _tiled_sums([x2], None, block_rows)
            return log_sum
    if nbytes <= _SINGLE_BLOCK_CAP:
        return _single_call(_single_sum_log_kernel, [x2])
    # TODO(synk): degenerate layouts (rows < 8 / huge last dim) above the single-block
    # cap fall back to a plain-XLA reduction.
    return jnp.sum(jnp.log(x2.astype(jnp.float32)))


def pallas_sum_sqdiff(a, b):
    """sum((a - b)^2) over all elements (float32 scalar)."""
    a2, b2 = _as_2d(a), _as_2d(b)
    rows, cols = a2.shape
    nbytes = int(a2.size) * a2.dtype.itemsize + int(b2.size) * b2.dtype.itemsize
    if nbytes > 2 * _SINGLE_MAX_BYTES:
        block_rows = _can_tile(
            rows, [cols * a2.dtype.itemsize, cols * b2.dtype.itemsize])
        if block_rows is not None:
            sq_sum, _ = _tiled_sums([], (a2, b2), block_rows)
            return sq_sum
    if nbytes <= 2 * _SINGLE_BLOCK_CAP:
        return _single_call(_single_sum_sqdiff_kernel, [a2, b2])
    # TODO(synk): degenerate layouts fall back to plain XLA.
    d = a2.astype(jnp.float32) - b2.astype(jnp.float32)
    return jnp.sum(d * d)


# ---------------------------------------------------------------------------
# RateDistortionLoss.forward equivalent
# ---------------------------------------------------------------------------
def rate_distortion_loss(output, target, lmbda=0.01):
    """JAX/Pallas equivalent of RateDistortionLoss.forward.

    output: {'likelihoods': dict[str -> array in (0, 1]], 'x_hat': array like target}
    target: (B, N, D) array.
    """
    B, N, _ = target.shape
    num_tokens = float(B * N)

    likelihoods = list(output['likelihoods'].values())
    x_hat = output['x_hat']

    total_bytes = sum(int(t.size) * t.dtype.itemsize
                      for t in likelihoods + [x_hat, target])

    if total_bytes <= _FUSED_MAX_BYTES:
        # One single-block pallas_call for the whole loss (single dispatch).
        log_sum, sq_sum = _fused_small_loss_sums(likelihoods, x_hat, target)
    else:
        # Large path: one fused tiled streaming pass over x_hat/target plus every
        # likelihood with a matching collapsed 2-D shape; the rest go individually.
        xh2, tg2 = _as_2d(x_hat), _as_2d(target)
        liks2 = [_as_2d(l) for l in likelihoods]
        matching = [l for l in liks2 if l.shape == xh2.shape]
        rest = [l for l in liks2 if l.shape != xh2.shape]

        rows, cols = xh2.shape
        row_bytes = ([cols * xh2.dtype.itemsize, cols * tg2.dtype.itemsize]
                     + [cols * l.dtype.itemsize for l in matching])
        block_rows = _can_tile(rows, row_bytes)
        if block_rows is not None:
            sq_sum, log_part = _tiled_sums(matching, (xh2, tg2), block_rows)
            log_sum = log_part if log_part is not None else jnp.float32(0.0)
        else:
            sq_sum = pallas_sum_sqdiff(xh2, tg2)
            log_sum = jnp.float32(0.0)
            rest = liks2
        for lik in rest:
            log_sum = log_sum + pallas_sum_log(lik)

    bpp_loss = log_sum / (-math.log(2) * num_tokens)
    mse_loss = sq_sum / float(target.size)
    loss = lmbda * (255.0 ** 2) * mse_loss + bpp_loss
    return {'bpp_loss': bpp_loss, 'mse_loss': mse_loss, 'loss': loss}


# ---------------------------------------------------------------------------
# Main
# ---------------------------------------------------------------------------
if __name__ == "__main__":
    key = jax.random.PRNGKey(0)
    keys = jax.random.split(key, 8)

    # ---- small case (fused single-block pallas_call path) --------------------
    B, N, D = 2, 8, 32
    Cy, Cz = 32, 16
    target = jax.random.normal(keys[0], (B, N, D), dtype=jnp.float32)
    x_hat = target + 0.05 * jax.random.normal(keys[1], (B, N, D), dtype=jnp.float32)
    lik_y = jax.nn.sigmoid(jax.random.normal(keys[2], (B, N, Cy), dtype=jnp.float32))
    lik_z = jax.nn.sigmoid(jax.random.normal(keys[3], (B, N, Cz), dtype=jnp.float32))
    output = {'x_hat': x_hat, 'likelihoods': {'y': lik_y, 'z': lik_z}}

    out = rate_distortion_loss(output, target, lmbda=0.01)
    out = jax.tree_util.tree_map(jax.block_until_ready, out)

    num_tokens = B * N
    ref_bpp = (jnp.sum(jnp.log(lik_y)) + jnp.sum(jnp.log(lik_z))) / (
        -math.log(2) * num_tokens)
    ref_mse = jnp.mean((x_hat - target) ** 2)
    ref_loss = 0.01 * 255.0 ** 2 * ref_mse + ref_bpp

    assert np.allclose(np.asarray(out['bpp_loss']), np.asarray(ref_bpp), rtol=1e-5, atol=1e-5)
    assert np.allclose(np.asarray(out['mse_loss']), np.asarray(ref_mse), rtol=1e-5, atol=1e-6)
    assert np.allclose(np.asarray(out['loss']), np.asarray(ref_loss), rtol=1e-5, atol=1e-5)

    # ---- larger case (fused tiled streaming path + tiled log path) -----------
    B2, N2, D2 = 2, 1536, 192
    Cz2 = 96
    target2 = jax.random.normal(keys[4], (B2, N2, D2), dtype=jnp.float32)
    x_hat2 = target2 + 0.05 * jax.random.normal(keys[5], (B2, N2, D2), dtype=jnp.float32)
    lik_y2 = jax.nn.sigmoid(jax.random.normal(keys[6], (B2, N2, D2), dtype=jnp.float32))
    lik_z2 = jax.nn.sigmoid(jax.random.normal(keys[7], (B2, N2, Cz2), dtype=jnp.float32))
    output2 = {'x_hat': x_hat2, 'likelihoods': {'y': lik_y2, 'z': lik_z2}}

    out2 = rate_distortion_loss(output2, target2, lmbda=0.01)
    out2 = jax.tree_util.tree_map(jax.block_until_ready, out2)

    num_tokens2 = B2 * N2
    ref_bpp2 = (jnp.sum(jnp.log(lik_y2)) + jnp.sum(jnp.log(lik_z2))) / (
        -math.log(2) * num_tokens2)
    ref_mse2 = jnp.mean((x_hat2 - target2) ** 2)
    ref_loss2 = 0.01 * 255.0 ** 2 * ref_mse2 + ref_bpp2

    assert np.allclose(np.asarray(out2['bpp_loss']), np.asarray(ref_bpp2), rtol=1e-4, atol=1e-3)
    assert np.allclose(np.asarray(out2['mse_loss']), np.asarray(ref_mse2), rtol=1e-4, atol=1e-6)
    assert np.allclose(np.asarray(out2['loss']), np.asarray(ref_loss2), rtol=1e-4, atol=1e-3)

    print("KERNEL_OK")
</pallas_src>

<mosaic_0001>
module attributes {stable_mosaic.version = 11 : i64} {
  func.func @kernel(%arg0: i32, %arg1: memref<16x32xf32, #tpu.memory_space<vmem>>, %arg2: memref<16x16xf32, #tpu.memory_space<vmem>>, %arg3: memref<16x32xf32, #tpu.memory_space<vmem>>, %arg4: memref<16x32xf32, #tpu.memory_space<vmem>>, %arg5: memref<1x1xf32, #tpu.memory_space<vmem>>, %arg6: memref<1x1xf32, #tpu.memory_space<vmem>>) attributes {dimension_semantics = [#tpu.dimension_semantics<arbitrary>], iteration_bounds = array<i64: 1>, scalar_prefetch = 0 : i64, scratch_operands = 0 : i64, tpu.core_type = #tpu.core_type<tc>, window_params = [{pipeline_mode = #tpu.pipeline_mode<synchronous>, transform_indices = @transform_0, window_bounds = array<i64: 16, 32>}, {pipeline_mode = #tpu.pipeline_mode<synchronous>, transform_indices = @transform_1, window_bounds = array<i64: 16, 16>}, {pipeline_mode = #tpu.pipeline_mode<synchronous>, transform_indices = @transform_2, window_bounds = array<i64: 16, 32>}, {pipeline_mode = #tpu.pipeline_mode<synchronous>, transform_indices = @transform_3, window_bounds = array<i64: 16, 32>}, {pipeline_mode = #tpu.pipeline_mode<synchronous>, transform_indices = @transform_4, window_bounds = array<i64: 1, 1>}, {pipeline_mode = #tpu.pipeline_mode<synchronous>, transform_indices = @transform_5, window_bounds = array<i64: 1, 1>}]} {
    %c0 = arith.constant 0 : index
    %c0_0 = arith.constant 0 : index
    %0 = vector.load %arg1[%c0, %c0_0] : memref<16x32xf32, #tpu.memory_space<vmem>>, vector<16x32xf32>
    %1 = math.log %0 : vector<16x32xf32>
    %2 = vector.shape_cast %1 : vector<16x32xf32> to vector<1x16x32xf32>
    %cst = arith.constant dense<0.000000e+00> : vector<1xf32>
    %3 = vector.multi_reduction <add>, %2, %cst [1, 2] : vector<1x16x32xf32> to vector<1xf32>
    %4 = vector.shape_cast %3 : vector<1xf32> to vector<1x1x1xf32>
    %5 = vector.extract %4[0, 0, 0] : f32 from vector<1x1x1xf32>
    %cst_1 = arith.constant 0.000000e+00 : f32
    %6 = arith.addf %cst_1, %5 : f32
    %c0_2 = arith.constant 0 : index
    %c0_3 = arith.constant 0 : index
    %7 = vector.load %arg2[%c0_2, %c0_3] : memref<16x16xf32, #tpu.memory_space<vmem>>, vector<16x16xf32>
    %8 = math.log %7 : vector<16x16xf32>
    %9 = vector.shape_cast %8 : vector<16x16xf32> to vector<1x16x16xf32>
    %cst_4 = arith.constant dense<0.000000e+00> : vector<1xf32>
    %10 = vector.multi_reduction <add>, %9, %cst_4 [1, 2] : vector<1x16x16xf32> to vector<1xf32>
    %11 = vector.shape_cast %10 : vector<1xf32> to vector<1x1x1xf32>
    %12 = vector.extract %11[0, 0, 0] : f32 from vector<1x1x1xf32>
    %13 = arith.addf %6, %12 : f32
    %14 = vector.broadcast %13 : f32 to vector<1x1xf32>
    %c0_5 = arith.constant 0 : index
    %c0_6 = arith.constant 0 : index
    %15 = vector.load %arg5[%c0_5, %c0_6] : memref<1x1xf32, #tpu.memory_space<vmem>>, vector<1x1xf32>
    tpu.vector_store %arg5[%c0_5, %c0_6], %14 {strides = array<i32>} : memref<1x1xf32, #tpu.memory_space<vmem>>, vector<1x1xf32>,
    %c0_7 = arith.constant 0 : index
    %c0_8 = arith.constant 0 : index
    %16 = vector.load %arg3[%c0_7, %c0_8] : memref<16x32xf32, #tpu.memory_space<vmem>>, vector<16x32xf32>
    %c0_9 = arith.constant 0 : index
    %c0_10 = arith.constant 0 : index
    %17 = vector.load %arg4[%c0_9, %c0_10] : memref<16x32xf32, #tpu.memory_space<vmem>>, vector<16x32xf32>
    %18 = arith.subf %16, %17 : vector<16x32xf32>
    %19 = arith.mulf %18, %18 : vector<16x32xf32>
    %20 = vector.shape_cast %19 : vector<16x32xf32> to vector<1x16x32xf32>
    %cst_11 = arith.constant dense<0.000000e+00> : vector<1xf32>
    %21 = vector.multi_reduction <add>, %20, %cst_11 [1, 2] : vector<1x16x32xf32> to vector<1xf32>
    %22 = vector.shape_cast %21 : vector<1xf32> to vector<1x1x1xf32>
    %23 = vector.extract %22[0, 0, 0] : f32 from vector<1x1x1xf32>
    %24 = vector.broadcast %23 : f32 to vector<1x1xf32>
    %c0_12 = arith.constant 0 : index
    %c0_13 = arith.constant 0 : index
    %25 = vector.load %arg6[%c0_12, %c0_13] : memref<1x1xf32, #tpu.memory_space<vmem>>, vector<1x1xf32>
    tpu.vector_store %arg6[%c0_12, %c0_13], %24 {strides = array<i32>} : memref<1x1xf32, #tpu.memory_space<vmem>>, vector<1x1xf32>,
    return
  }
  func.func @transform_0(%arg0: i32) -> (i32, i32) {
    %c0_i32 = arith.constant 0 : i32
    %c0_i32_0 = arith.constant 0 : i32
    %c0_i32_1 = arith.constant 0 : i32
    return %c0_i32, %c0_i32_0 : i32, i32
  }
  func.func @transform_1(%arg0: i32) -> (i32, i32) {
    %c0_i32 = arith.constant 0 : i32
    %c0_i32_0 = arith.constant 0 : i32
    %c0_i32_1 = arith.constant 0 : i32
    return %c0_i32, %c0_i32_0 : i32, i32
  }
  func.func @transform_2(%arg0: i32) -> (i32, i32) {
    %c0_i32 = arith.constant 0 : i32
    %c0_i32_0 = arith.constant 0 : i32
    %c0_i32_1 = arith.constant 0 : i32
    return %c0_i32, %c0_i32_0 : i32, i32
  }
  func.func @transform_3(%arg0: i32) -> (i32, i32) {
    %c0_i32 = arith.constant 0 : i32
    %c0_i32_0 = arith.constant 0 : i32
    %c0_i32_1 = arith.constant 0 : i32
    return %c0_i32, %c0_i32_0 : i32, i32
  }
  func.func @transform_4(%arg0: i32) -> (i32, i32) {
    %c0_i32 = arith.constant 0 : i32
    %c0_i32_0 = arith.constant 0 : i32
    %c0_i32_1 = arith.constant 0 : i32
    return %c0_i32, %c0_i32_0 : i32, i32
  }
  func.func @transform_5(%arg0: i32) -> (i32, i32) {
    %c0_i32 = arith.constant 0 : i32
    %c0_i32_0 = arith.constant 0 : i32
    %c0_i32_1 = arith.constant 0 : i32
    return %c0_i32, %c0_i32_0 : i32, i32
  }
}

</mosaic_0001>

<llo_original>
// kernel: tpu_custom_call.1
$region0: #{tpu_custom_call.1}
  #allocation0 [shape = 'u32[]', space=smem, size = 0x4, offset = 0x4, fixed_abs, tag = 'smem constant byte address 0x4 - core index']
  #allocation1 [shape = 'u32[72,128]{1,0:T(1,128)}', space=vmem, size = 0x9000, scoped, tag = 'internal scratch']
  %s0 = inlined_call_operand.hbm [shape: f32[16,32], index: 0, kind: input, shape index: {}]
  %s1 = inlined_call_operand.hbm [shape: f32[16,16], index: 1, kind: input, shape index: {}]
  %s2 = inlined_call_operand.hbm [shape: f32[16,32], index: 2, kind: input, shape index: {}]
  %s3 = inlined_call_operand.hbm [shape: f32[16,32], index: 3, kind: input, shape index: {}]
  %s4 = inlined_call_operand.hbm [shape: f32[1,1], index: 4, kind: output, shape index: {0}]
  %s5 = inlined_call_operand.hbm [shape: f32[1,1], index: 5, kind: output, shape index: {1}]
  %6 = xla_tuple %s4, %s5
  %s7 = sld [smem:[#allocation0]]
  $region50: #{tpu_custom_call.1} parent=0
    _
  %s9 = ssub.s32 1, %s7
  %s10 = scalar_select 0, %s9, %s7
  $region1: #{tpu_custom_call.1} parent=0
    #allocation2 [shape = 'u8[8192]{0}', space=vmem, size = 0x2000, scoped, tag = 'input window, operand 0, single buffered']
    #allocation3 [shape = 's32[1]{0}', space=sflag, size = 0x4, scoped, tag = 'scoped memory for tpu_custom_call.1']
    #allocation4 [shape = 's32[1]{0}', space=sflag, size = 0x4, scoped, tag = 'scoped memory for tpu_custom_call.1']
    #allocation5 [shape = 'u8[8192]{0}', space=vmem, size = 0x2000, scoped, tag = 'input window, operand 1, single buffered']
    #allocation6 [shape = 's32[1]{0}', space=sflag, size = 0x4, scoped, tag = 'scoped memory for tpu_custom_call.1']
    #allocation7 [shape = 'u8[8192]{0}', space=vmem, size = 0x2000, scoped, tag = 'input window, operand 2, single buffered']
    #allocation8 [shape = 'u8[8192]{0}', space=vmem, size = 0x2000, scoped, tag = 'input window, operand 3, single buffered']
    #allocation9 [shape = 's32[1]{0}', space=sflag, size = 0x4, scoped, tag = 'scoped memory for tpu_custom_call.1']
    #allocation10 [shape = 'u8[512]{0}', space=vmem, size = 0x400, scoped, tag = 'output window, operand 0, single buffered']
    #allocation11 [shape = 'u8[512]{0}', space=vmem, size = 0x400, scoped, tag = 'output window, operand 1, single buffered']
    #allocation12 [shape = 's32[1]{0}', space=sflag, size = 0x4, scoped, tag = 'scoped memory for tpu_custom_call.1']
    %11 = vsyncpa [#allocation3], 0
    %12 = vsyncpa [#allocation6], 0
    %13 = vsyncpa [#allocation9], 0
    %14 = vsyncpa [#allocation4], 0
    %15 = vsyncpa [#allocation12], 0
    // Predicated region
    $region2: #{tpu_custom_call.1} parent=1 // pred_check
      _
    $region3: #{tpu_custom_call.1} parent=1 // pred_check_branch
      %17 = sbr.rel (0) target = $region5
    $region4: #{tpu_custom_call.1} parent=1 // pred_region
      %19 = vsyncadd [#allocation3], 0
      %s20 = sshll.u32 %s0, 4
      %s21 = int_to_ptr.hbm [resolvable:$true] %s20
      %s22 = sshll.u32 [#allocation2], 4
      %s23 = int_to_ptr.vmem [resolvable:$true] %s22
      %28 = dma.hbm_to_vmem [thread:$0]  %s21, 256, %s23, [#allocation3], 128, 128, 8
    $region5: #{tpu_custom_call.1} parent=1 // pred_fallthru
      _
    // Predicated region
    $region6: #{tpu_custom_call.1} parent=1 // pred_check
      _
    $region7: #{tpu_custom_call.1} parent=1 // pred_check_branch
      %30 = sbr.rel (0) target = $region9
    $region8: #{tpu_custom_call.1} parent=1 // pred_region
      %32 = vsyncadd [#allocation6], 0
      %s33 = sshll.u32 %s1, 4
      %s34 = int_to_ptr.hbm [resolvable:$true] %s33
      %s35 = sshll.u32 [#allocation5], 4
      %s36 = int_to_ptr.vmem [resolvable:$true] %s35
      %41 = dma.hbm_to_vmem [thread:$0]  %s34, 256, %s36, [#allocation6], 128, 128, 8
    $region9: #{tpu_custom_call.1} parent=1 // pred_fallthru
      _
    // Predicated region
    $region10: #{tpu_custom_call.1} parent=1 // pred_check
      _
    $region11: #{tpu_custom_call.1} parent=1 // pred_check_branch
      %43 = sbr.rel (0) target = $region13
    $region12: #{tpu_custom_call.1} parent=1 // pred_region
      %45 = vsyncadd [#allocation6], 0
      %s46 = sshll.u32 %s2, 4
      %s47 = int_to_ptr.hbm [resolvable:$true] %s46
      %s48 = sshll.u32 [#allocation7], 4
      %s49 = int_to_ptr.vmem [resolvable:$true] %s48
      %54 = dma.hbm_to_vmem [thread:$0]  %s47, 256, %s49, [#allocation6], 128, 128, 8
    $region13: #{tpu_custom_call.1} parent=1 // pred_fallthru
      _
    // Predicated region
    $region14: #{tpu_custom_call.1} parent=1 // pred_check
      _
    $region15: #{tpu_custom_call.1} parent=1 // pred_check_branch
      %56 = sbr.rel (0) target = $region17
    $region16: #{tpu_custom_call.1} parent=1 // pred_region
      %58 = vsyncadd [#allocation9], 0
      %s59 = sshll.u32 %s3, 4
      %s60 = int_to_ptr.hbm [resolvable:$true] %s59
      %s61 = sshll.u32 [#allocation8], 4
      %s62 = int_to_ptr.vmem [resolvable:$true] %s61
      %67 = dma.hbm_to_vmem [thread:$0]  %s60, 256, %s62, [#allocation9], 128, 128, 8
    $region17: #{tpu_custom_call.1} parent=1 // pred_fallthru
      _
    // Predicated region
    $region18: #{tpu_custom_call.1} parent=1 // pred_check
      _
    $region19: #{tpu_custom_call.1} parent=1 // pred_check_branch
      %69 = sbr.rel (0) target = $region21
    $region20: #{tpu_custom_call.1} parent=1 // pred_region
      %71 = dma.done [#allocation3], 256
    $region21: #{tpu_custom_call.1} parent=1 // pred_fallthru
      _
    // Predicated region
    $region22: #{tpu_custom_call.1} parent=1 // pred_check
      _
    $region23: #{tpu_custom_call.1} parent=1 // pred_check_branch
      %73 = sbr.rel (0) target = $region25
    $region24: #{tpu_custom_call.1} parent=1 // pred_region
      %75 = dma.done [#allocation6], 256
    $region25: #{tpu_custom_call.1} parent=1 // pred_fallthru
      _
    // Predicated region
    $region26: #{tpu_custom_call.1} parent=1 // pred_check
      _
    $region27: #{tpu_custom_call.1} parent=1 // pred_check_branch
      %77 = sbr.rel (0) target = $region29
    $region28: #{tpu_custom_call.1} parent=1 // pred_region
      %79 = dma.done [#allocation6], 256
    $region29: #{tpu_custom_call.1} parent=1 // pred_fallthru
      _
    // Predicated region
    $region30: #{tpu_custom_call.1} parent=1 // pred_check
      _
    $region31: #{tpu_custom_call.1} parent=1 // pred_check_branch
      %81 = sbr.rel (0) target = $region33
    $region32: #{tpu_custom_call.1} parent=1 // pred_region
      %83 = dma.done [#allocation9], 256
    $region33: #{tpu_custom_call.1} parent=1 // pred_fallthru
      _
    %v84 = vld [vmem:[#allocation2] sm:$0xff]
    %v85 = vld [vmem:[#allocation2 + $0x8] sm:$0xff]
    %v86 = vlog2.pop %v84
    %v87 = vmul.f32 %v86, 0.6931472
    %v88 = vlog2.pop %v85
    %v89 = vmul.f32 %v88, 0.6931472
    %vm90 = vcmask 261120
    %v91 = vsel %vm90, %v87, 0.0
    %v92 = vsel %vm90, %v89, 0.0
    %v93 = vadd.f32 %v91, %v92
    %94 = vadd.xlane.f32.xlu0 %v93
    %v95 = vpop.xlane.xlu0 %94
    %v96 = vrot.slane %v95, 4
    %v97 = vadd.f32 %v95, %v96
    %v98 = vrot.slane %v97, 2
    %v99 = vadd.f32 %v97, %v98
    %v100 = vrot.slane %v99, 1
    %v101 = vadd.f32 %v99, %v100
    %s102 = vtos %v101
    %s103 = sadd.f32 %s102, 0.0
    %v104 = vld [vmem:[#allocation5] sm:$0xff]
    %v105 = vld [vmem:[#allocation5 + $0x8] sm:$0xff]
    %v106 = vlog2.pop %v104
    %v107 = vmul.f32 %v106, 0.6931472
    %v108 = vlog2.pop %v105
    %v109 = vmul.f32 %v108, 0.6931472
    %vm110 = vcmask 130048
    %v111 = vsel %vm110, %v107, 0.0
    %v112 = vsel %vm110, %v109, 0.0
    %v113 = vadd.f32 %v111, %v112
    %114 = vadd.xlane.f32.xlu0 %v113
    %v115 = vpop.xlane.xlu0 %114
    %v116 = vrot.slane %v115, 4
    %v117 = vadd.f32 %v115, %v116
    %v118 = vrot.slane %v117, 2
    %v119 = vadd.f32 %v117, %v118
    %v120 = vrot.slane %v119, 1
    %v121 = vadd.f32 %v119, %v120
    %s122 = vtos %v121
    %s123 = sadd.f32 %s103, %s122
    %v124 = vstv %s123
    %vm125 = vcmask 0
    %126 = vst.msk [vmem:[#allocation10] sm:$0x1] %vm125, %v124
    %v127 = vld [vmem:[#allocation7] sm:$0xff]
    %v128 = vld [vmem:[#allocation7 + $0x8] sm:$0xff]
    %v129 = vld [vmem:[#allocation8] sm:$0xff]
    %v130 = vld [vmem:[#allocation8 + $0x8] sm:$0xff]
    %v131 = vsub.f32 %v127, %v129
    %v132 = vsub.f32 %v128, %v130
    %v133 = vmul.f32 %v131, %v131
    %v134 = vmul.f32 %v132, %v132
    %v135 = vsel %vm90, %v133, 0.0
    %v136 = vsel %vm90, %v134, 0.0
    %v137 = vadd.f32 %v135, %v136
    %138 = vadd.xlane.f32.xlu0 %v137
    %v139 = vpop.xlane.xlu0 %138
    %v140 = vrot.slane %v139, 4
    %v141 = vadd.f32 %v139, %v140
    %v142 = vrot.slane %v141, 2
    %v143 = vadd.f32 %v141, %v142
    %v144 = vrot.slane %v143, 1
    %v145 = vadd.f32 %v143, %v144
    %s146 = vtos %v145
    %v147 = vstv %s146
    %148 = vst.msk [vmem:[#allocation11] sm:$0x1] %vm125, %v147
    // Predicated region
    $region34: #{tpu_custom_call.1} parent=1 // pred_check
      _
    $region35: #{tpu_custom_call.1} parent=1 // pred_check_branch
      %150 = sbr.rel (0) target = $region37
    $region36: #{tpu_custom_call.1} parent=1 // pred_region
      %152 = vsyncadd [#allocation4], 0
      %s154 = sshll.u32 [#allocation10], 4
      %s155 = int_to_ptr.vmem [resolvable:$true] %s154
      %s156 = sshll.u32 %s4, 4
      %s157 = int_to_ptr.hbm [resolvable:$true] %s156
      %159 = dma.vmem_to_hbm [thread:$0]  %s155, 16, %s157, [#allocation4]
    $region37: #{tpu_custom_call.1} parent=1 // pred_fallthru
      _
    // Predicated region
    $region38: #{tpu_custom_call.1} parent=1 // pred_check
      _
    $region39: #{tpu_custom_call.1} parent=1 // pred_check_branch
      %161 = sbr.rel (0) target = $region41
    $region40: #{tpu_custom_call.1} parent=1 // pred_region
      %163 = vsyncadd [#allocation12], 0
      %s165 = sshll.u32 [#allocation11], 4
      %s166 = int_to_ptr.vmem [resolvable:$true] %s165
      %s167 = sshll.u32 %s5, 4
      %s168 = int_to_ptr.hbm [resolvable:$true] %s167
      %170 = dma.vmem_to_hbm [thread:$0]  %s166, 16, %s168, [#allocation12]
    $region41: #{tpu_custom_call.1} parent=1 // pred_fallthru
      _
    // Predicated region
    $region42: #{tpu_custom_call.1} parent=1 // pred_check
      _
    $region43: #{tpu_custom_call.1} parent=1 // pred_check_branch
      %172 = sbr.rel (0) target = $region45
    $region44: #{tpu_custom_call.1} parent=1 // pred_region
      %174 = dma.done [#allocation4], 16
    $region45: #{tpu_custom_call.1} parent=1 // pred_fallthru
      _
    // Predicated region
    $region46: #{tpu_custom_call.1} parent=1 // pred_check
      _
    $region47: #{tpu_custom_call.1} parent=1 // pred_check_branch
      %176 = sbr.rel (0) target = $region49
    $region48: #{tpu_custom_call.1} parent=1 // pred_region
      %178 = dma.done [#allocation12], 16
    $region49: #{tpu_custom_call.1} parent=1 // pred_fallthru
      _
    %179 = vsyncpa [#allocation3], 1
    %180 = vsyncpa [#allocation6], 1
    %181 = vsyncpa [#allocation9], 1
    %182 = vsyncpa [#allocation4], 1
    %183 = vsyncpa [#allocation12], 1

</llo_original>
